<compile_context>
chip_gen: v7x
topology: tpu7x:2x2x1
jax: 0.10.0
libtpu: 0.0.40
codegen_flags: <defaults>
</compile_context>

<pallas_src>
import functools
import math

import jax
import jax.numpy as jnp
from jax import lax
from jax.experimental import pallas as pl
from jax.experimental.pallas import tpu as pltpu


def _pad_up(n, m):
    return (n + m - 1) // m * m


_RNE_MAGIC = 12582912.0  # 1.5 * 2**23: add/sub gives round-to-nearest-even int


def _fp8_e4m3_roundtrip(x):
    """Round f32 values onto the float8_e4m3fn grid (RNE); result stays f32.

    Emulates torch's `.to(torch.float8_e4m3fn)` round-trip of the hidden
    activation inside the kernel with f32/i32 VPU ops only (no fp8 dtype in
    Mosaic).  Matches the IEEE RNE cast over the finite range (GELU outputs
    never reach the 448 saturation point here).  NOTE: relies on the magic
    add/sub not being reassociated (true under default XLA).
    """
    a = jnp.abs(x)
    bits = pltpu.bitcast(a, jnp.int32)
    exp = jnp.maximum((bits >> 23) - 127, -6)                 # floor(log2 a), clamp subnormals
    step = pltpu.bitcast((exp + 124) << 23, jnp.float32)      # 2**(exp-3): e4m3 quantum
    inv_step = pltpu.bitcast((130 - exp) << 23, jnp.float32)  # 2**(3-exp) (exact)
    q = ((a * inv_step + _RNE_MAGIC) - _RNE_MAGIC) * step     # RNE onto the grid
    q = jnp.minimum(q, 448.0)
    return jnp.where(x < 0.0, -q, q)


def _gelu(h):
    # tanh-form GELU (EUP).  TODO(synk): switch to exact erf GELU if bit-parity
    # with torch nn.GELU(approximate='none') is required.
    return 0.5 * h * (1.0 + jnp.tanh(0.7978845608028654
                                     * (h + 0.044715 * h * h * h)))


# ---------------------------------------------------------------------------
# Fused grouped-expert kernel.
# grid = (row_blocks [parallel], hidden_chunks [arbitrary, innermost]).
# Each row block holds tile_m token-copies of a single expert (scalar-
# prefetched block->expert map drives the weight index_maps), so only that
# expert's weights are streamed for the block.
# ---------------------------------------------------------------------------
def _expert_block_kernel(bexp_ref, bval_ref, x_ref, w1_ref, b1_ref, w2_ref,
                         b2_ref, o_ref, acc_ref):
    del bexp_ref  # only consumed by the index_maps
    b = pl.program_id(0)
    c = pl.program_id(1)

    @pl.when(c == 0)
    def _init():
        acc_ref[...] = jnp.zeros_like(acc_ref)

    # Skip the (at most E) trailing padding blocks entirely.
    @pl.when(bval_ref[b] > 0)
    def _compute():
        # fc1 on this hidden chunk: x @ W1_chunk^T  (exact fp8 values in bf16
        # -> exact products, f32 accumulation == fp8 GEMM accumulator).
        h = lax.dot_general(x_ref[...], w1_ref[0],
                            (((1,), (1,)), ((), ())),
                            preferred_element_type=jnp.float32)
        h = h + b1_ref[0]
        g = _gelu(h)
        # Hidden activation -> fp8 e4m3 grid in-VMEM (torch casts the GELU
        # output to float8_e4m3fn before fc2); never touches HBM.
        gq = _fp8_e4m3_roundtrip(g).astype(jnp.bfloat16)
        # fc2 on this hidden chunk, accumulated over chunks in f32.
        acc_ref[...] += lax.dot_general(gq, w2_ref[0],
                                        (((1,), (1,)), ((), ())),
                                        preferred_element_type=jnp.float32)

    @pl.when(c == pl.num_programs(1) - 1)
    def _store():
        o_ref[...] = (acc_ref[...] + b2_ref[0]).astype(o_ref.dtype)


def grouped_experts(block_expert, block_valid, x_rows, w1q, b1k, w2q, b2k,
                    *, tile_m, h_chunk, vmem_limit_bytes):
    m_pad, in_pad = x_rows.shape
    num_experts, h_pad, _ = w1q.shape
    o_pad = w2q.shape[1]
    num_blocks = m_pad // tile_m
    num_chunks = h_pad // h_chunk
    return pl.pallas_call(
        _expert_block_kernel,
        out_shape=jax.ShapeDtypeStruct((m_pad, o_pad), jnp.bfloat16),
        grid_spec=pltpu.PrefetchScalarGridSpec(
            num_scalar_prefetch=2,          # 1-D block->expert map + 1-D valid flags (SMEM)
            grid=(num_blocks, num_chunks),
            in_specs=[
                # lhs rows: constant across the chunk axis -> DMA'd once per block.
                pl.BlockSpec((tile_m, in_pad), lambda b, c, be, bv: (b, 0)),
                # Per-expert weight/bias blocks, selected by the prefetched map;
                # consecutive blocks of the same expert keep the same block
                # index -> Pallas skips the weight re-DMA.
                pl.BlockSpec((1, h_chunk, in_pad), lambda b, c, be, bv: (be[b], c, 0)),
                pl.BlockSpec((1, 1, h_chunk), lambda b, c, be, bv: (be[b], 0, c)),
                pl.BlockSpec((1, o_pad, h_chunk), lambda b, c, be, bv: (be[b], 0, c)),
                pl.BlockSpec((1, 1, o_pad), lambda b, c, be, bv: (be[b], 0, 0)),
            ],
            out_specs=pl.BlockSpec((tile_m, o_pad), lambda b, c, be, bv: (b, 0)),
            scratch_shapes=[pltpu.VMEM((tile_m, o_pad), jnp.float32)],
        ),
        compiler_params=pltpu.CompilerParams(
            dimension_semantics=("parallel", "arbitrary"),
            # 64 MiB: safe on v5e/v6e (128 MiB physical) and at the v7x per-TC
            # physical size; at tile_m=512 / h_chunk<=512 the double-buffered
            # blocks + f32 accumulator stay well below it even for 4k dims.
            vmem_limit_bytes=vmem_limit_bytes,
        ),
    )(block_expert, block_valid, x_rows, w1q, b1k, w2q, b2k)


# ---------------------------------------------------------------------------
# Parameter init (mirrors the PyTorch __init__ shapes; weights fp8-quantized
# and lane-padded once here, not per forward call).
# ---------------------------------------------------------------------------
def init_moe_params(key, input_dim, hidden_dim, output_dim, num_experts):
    in1 = _pad_up(input_dim, 128)    # DeepGEMM fc1 in_features_padded
    out1 = _pad_up(hidden_dim, 64)   # fc1 out_features_padded
    in2 = _pad_up(hidden_dim, 128)   # fc2 in_features_padded
    out2 = _pad_up(output_dim, 64)   # fc2 out_features_padded
    h_pad = _pad_up(hidden_dim, 128)  # kernel hidden lanes (== in2)
    o_pad = _pad_up(output_dim, 128)  # kernel output lanes

    k_wr, k_br, k_w1, k_w2 = jax.random.split(key, 4)
    bound = 1.0 / math.sqrt(input_dim)
    wr = jax.random.uniform(k_wr, (num_experts, input_dim), jnp.float32, -bound, bound)
    br = jax.random.uniform(k_br, (num_experts,), jnp.float32, -bound, bound)

    w1 = jax.random.normal(k_w1, (num_experts, out1, in1), jnp.float32) \
        * (1.0 / math.sqrt(input_dim))
    w2 = jax.random.normal(k_w2, (num_experts, out2, in2), jnp.float32) \
        * (1.0 / math.sqrt(hidden_dim))

    # fp8-quantize weights ONCE (hoisted out of forward); exact fp8 values held
    # in bf16 for the MXU.  TODO(synk): fp8 HBM storage / native fp8 MXU on v7x.
    w1q = jnp.zeros((num_experts, h_pad, in1), jnp.bfloat16)
    w1q = w1q.at[:, :out1, :].set(w1.astype(jnp.float8_e4m3fn).astype(jnp.bfloat16))
    b1k = jnp.zeros((num_experts, 1, h_pad), jnp.float32)      # torch bias init = 0

    w2q = jnp.zeros((num_experts, o_pad, h_pad), jnp.bfloat16)
    w2q = w2q.at[:, :out2, :].set(w2.astype(jnp.float8_e4m3fn).astype(jnp.bfloat16))
    # torch slices fc1's output to hidden_dim before fc2; zero the corresponding
    # fc2 weight columns once instead of masking the hidden activation in-kernel.
    w2q = w2q.at[:, :, hidden_dim:].set(0)
    b2k = jnp.zeros((num_experts, 1, o_pad), jnp.float32)

    return dict(wr=wr, br=br, w1q=w1q, b1k=b1k, w2q=w2q, b2k=b2k,
                input_dim=input_dim, hidden_dim=hidden_dim,
                output_dim=output_dim, num_experts=num_experts,
                in_pad1=in1, h_pad=h_pad, o_pad=o_pad)


# ---------------------------------------------------------------------------
# MoE forward: router/softmax/top-k + grouped-GEMM scheduling in XLA glue,
# fused expert compute in Pallas, gated un-sort scatter-add in glue.
# ---------------------------------------------------------------------------
def moe_forward(params, x, *, k=2, balance_coef=0.01, return_aux_loss=True):
    b, s, d = x.shape
    n = b * s
    num_experts = params["num_experts"]
    out_dim = params["output_dim"]
    in_pad = params["in_pad1"]
    h_pad = params["h_pad"]

    x2d = x.reshape(n, d).astype(jnp.float32)

    # ---- router (tiny GEMM, <1% of FLOPs -> plain XLA) + top-k gating ----
    logits = x2d @ params["wr"].T + params["br"]
    probs = jax.nn.softmax(logits, axis=-1)
    vals, idx = lax.top_k(probs, k)
    vals = vals / jnp.sum(vals, axis=-1, keepdims=True)

    # ---- aux load-balancing loss: coef * kl_div(log(p_mean), uniform, 'batchmean')
    p_mean = probs.mean(axis=0)
    uniform = jnp.full((num_experts,), 1.0 / num_experts, jnp.float32)
    aux_loss = balance_coef * jnp.sum(
        uniform * (jnp.log(uniform) - jnp.log(p_mean))) / num_experts

    # ---- activations -> fp8 grid (matches DeepGEMM_Linear), lane-padded ----
    x_pad = jnp.zeros((n, in_pad), jnp.float32).at[:, :d].set(x2d)
    xq = x_pad.astype(jnp.float8_e4m3fn).astype(jnp.bfloat16)

    # ---- grouped-GEMM scheduling: sort token copies by expert ----
    nk = n * k
    tile_m = min(512, _pad_up(nk, 8))
    m_pad = _pad_up(nk + num_experts * (tile_m - 1), tile_m)   # worst-case padded rows
    num_blocks = m_pad // tile_m

    expert_flat = idx.reshape(-1).astype(jnp.int32)            # (n*k,)
    gate_flat = vals.reshape(-1)
    token_flat = jnp.repeat(jnp.arange(n, dtype=jnp.int32), k)

    order = jnp.argsort(expert_flat)
    sorted_expert = expert_flat[order]
    sorted_token = token_flat[order]
    sorted_gate = gate_flat[order]

    group_sizes = jnp.sum(
        expert_flat[:, None] == jnp.arange(num_experts, dtype=jnp.int32)[None, :],
        axis=0).astype(jnp.int32)                              # (E,)
    blocks_per_group = (group_sizes + tile_m - 1) // tile_m
    cum_blocks = jnp.cumsum(blocks_per_group)                  # inclusive
    block_start = cum_blocks - blocks_per_group                # exclusive
    group_start = jnp.cumsum(group_sizes) - group_sizes        # exclusive

    # Destination row of each sorted token copy inside its expert's padded,
    # tile_m-aligned region.
    rank = jnp.arange(nk, dtype=jnp.int32) - group_start[sorted_expert]
    dest = (tile_m * block_start[sorted_expert] + rank).astype(jnp.int32)

    x_rows = jnp.zeros((m_pad, in_pad), jnp.bfloat16).at[dest].set(xq[sorted_token])
    row_token = jnp.full((m_pad,), n, jnp.int32).at[dest].set(sorted_token)
    row_gate = jnp.zeros((m_pad,), jnp.float32).at[dest].set(sorted_gate)

    # Per-block expert id (1-D int32 -> SMEM).  Inactive trailing blocks reuse
    # the last active expert so they trigger no extra weight DMA, and a valid
    # flag lets the kernel skip their compute.
    block_ids = jnp.arange(num_blocks, dtype=jnp.int32)
    num_active = cum_blocks[-1]
    raw_expert = jnp.minimum(
        jnp.searchsorted(cum_blocks, block_ids, side="right"),
        num_experts - 1).astype(jnp.int32)
    last_expert = raw_expert[jnp.maximum(num_active - 1, 0)]
    block_expert = jnp.where(block_ids < num_active, raw_expert, last_expert).astype(jnp.int32)
    block_valid = (block_ids < num_active).astype(jnp.int32)

    # Hidden-dim chunk: bounds VMEM on v7x (64 MiB) for big hidden dims; a
    # single chunk for small models.
    h_chunk = h_pad if h_pad <= 512 else math.gcd(h_pad, 512)

    out_rows = grouped_experts(block_expert, block_valid, x_rows,
                               params["w1q"], params["b1k"],
                               params["w2q"], params["b2k"],
                               tile_m=tile_m, h_chunk=h_chunk,
                               vmem_limit_bytes=64 * 1024 * 1024)

    # ---- gated un-sort: scatter-add expert outputs back to token rows.
    # (torch gates the bf16 expert output; padding rows map to a dummy row.)
    contrib = out_rows[:, :out_dim].astype(jnp.float32) * row_gate[:, None]
    final = jnp.zeros((n + 1, out_dim), jnp.float32).at[row_token].add(contrib)
    out = final[:n].astype(jnp.bfloat16).reshape(b, s, out_dim)

    if return_aux_loss:
        return out, aux_loss
    return out


# ---------------------------------------------------------------------------
# Dense pure-JAX reference of the same quantized math (for self-check).
# ---------------------------------------------------------------------------
def moe_reference(params, x, *, k=2):
    b, s, d = x.shape
    n = b * s
    num_experts = params["num_experts"]
    out_dim = params["output_dim"]
    in_pad = params["in_pad1"]

    x2d = x.reshape(n, d).astype(jnp.float32)
    logits = x2d @ params["wr"].T + params["br"]
    probs = jax.nn.softmax(logits, axis=-1)
    vals, idx = lax.top_k(probs, k)
    vals = vals / jnp.sum(vals, axis=-1, keepdims=True)
    gates = jnp.zeros((n, num_experts), jnp.float32)
    for j in range(k):
        gates = gates + jax.nn.one_hot(idx[:, j], num_experts,
                                       dtype=jnp.float32) * vals[:, j:j + 1]

    x_pad = jnp.zeros((n, in_pad), jnp.float32).at[:, :d].set(x2d)
    xq = x_pad.astype(jnp.float8_e4m3fn).astype(jnp.bfloat16)

    final = jnp.zeros((n, out_dim), jnp.float32)
    for e in range(num_experts):
        h = jnp.dot(xq, params["w1q"][e].T,
                    preferred_element_type=jnp.float32) + params["b1k"][e, 0]
        g = _gelu(h)
        gq = g.astype(jnp.float8_e4m3fn).astype(jnp.bfloat16)
        o = jnp.dot(gq, params["w2q"][e].T,
                    preferred_element_type=jnp.float32) + params["b2k"][e, 0]
        o = o[:, :out_dim].astype(jnp.bfloat16)
        final = final + o.astype(jnp.float32) * gates[:, e:e + 1]
    return final.astype(jnp.bfloat16).reshape(b, s, out_dim)


if __name__ == "__main__":
    # output_dim == input_dim (the PyTorch code accumulates expert outputs into
    # a zeros_like(x_reshaped) buffer).
    B, S, D = 2, 8, 32
    HIDDEN = 64
    NUM_EXPERTS, TOP_K = 8, 2

    key = jax.random.PRNGKey(0)
    kx, kp = jax.random.split(key)
    x = jax.random.normal(kx, (B, S, D), jnp.float32)
    params = init_moe_params(kp, D, HIDDEN, D, NUM_EXPERTS)

    fwd = jax.jit(functools.partial(moe_forward, params, k=TOP_K,
                                    return_aux_loss=True))
    out, aux_loss = fwd(x)
    jax.block_until_ready((out, aux_loss))

    assert out.shape == (B, S, D) and out.dtype == jnp.bfloat16
    assert bool(jnp.isfinite(out.astype(jnp.float32)).all())
    assert bool(jnp.isfinite(aux_loss))

    # Cross-check the grouped-GEMM kernel path against the dense reference.
    ref = moe_reference(params, x, k=TOP_K)
    err = float(jnp.max(jnp.abs(out.astype(jnp.float32) - ref.astype(jnp.float32))))
    assert err < 0.2, f"max abs err vs reference: {err}"

    print("KERNEL_OK")
</pallas_src>

<mosaic_0001>
module attributes {stable_mosaic.version = 11 : i64} {
  func.func @_expert_block_kernel(%arg0: i32, %arg1: i32, %arg2: memref<9xi32, #tpu.memory_space<smem>>, %arg3: memref<9xi32, #tpu.memory_space<smem>>, %arg4: memref<32x128xbf16, #tpu.memory_space<vmem>>, %arg5: memref<1x128x128xbf16, #tpu.memory_space<vmem>>, %arg6: memref<1x1x128xf32, #tpu.memory_space<vmem>>, %arg7: memref<1x128x128xbf16, #tpu.memory_space<vmem>>, %arg8: memref<1x1x128xf32, #tpu.memory_space<vmem>>, %arg9: memref<32x128xbf16, #tpu.memory_space<vmem>>, %arg10: memref<32x128xf32, #tpu.memory_space<vmem>>) attributes {dimension_semantics = [#tpu.dimension_semantics<parallel>, #tpu.dimension_semantics<arbitrary>], iteration_bounds = array<i64: 9, 1>, scalar_prefetch = 2 : i64, scratch_operands = 1 : i64, tpu.core_type = #tpu.core_type<tc>, window_params = [{transform_indices = @transform_0, window_bounds = array<i64: 32, 128>}, {transform_indices = @transform_1, window_bounds = array<i64: 1, 128, 128>}, {transform_indices = @transform_2, window_bounds = array<i64: 1, 1, 128>}, {transform_indices = @transform_3, window_bounds = array<i64: 1, 128, 128>}, {transform_indices = @transform_4, window_bounds = array<i64: 1, 1, 128>}, {transform_indices = @transform_5, window_bounds = array<i64: 32, 128>}]} {
    %c0_i32 = arith.constant 0 : i32
    %0 = arith.cmpi eq, %arg1, %c0_i32 : i32
    %1 = arith.extui %0 : i1 to i32
    %c0_i32_0 = arith.constant 0 : i32
    %2 = arith.cmpi ne, %1, %c0_i32_0 : i32
    scf.if %2 {
      %cst = arith.constant 0.000000e+00 : f32
      %11 = vector.broadcast %cst : f32 to vector<32x128xf32>
      %c0 = arith.constant 0 : index
      %c0_5 = arith.constant 0 : index
      %12 = vector.load %arg10[%c0, %c0_5] : memref<32x128xf32, #tpu.memory_space<vmem>>, vector<32x128xf32>
      tpu.vector_store %arg10[%c0, %c0_5], %11 {strides = array<i32>} : memref<32x128xf32, #tpu.memory_space<vmem>>, vector<32x128xf32>,
    } else {
    }
    %3 = arith.index_cast %arg0 : i32 to index
    %4 = memref.load %arg3[%3] : memref<9xi32, #tpu.memory_space<smem>>
    %c0_i32_1 = arith.constant 0 : i32
    %5 = arith.cmpi sgt, %4, %c0_i32_1 : i32
    %6 = arith.extui %5 : i1 to i32
    %c0_i32_2 = arith.constant 0 : i32
    %7 = arith.cmpi ne, %6, %c0_i32_2 : i32
    scf.if %7 {
      %c0 = arith.constant 0 : index
      %c0_5 = arith.constant 0 : index
      %11 = vector.load %arg4[%c0, %c0_5] : memref<32x128xbf16, #tpu.memory_space<vmem>>, vector<32x128xbf16>
      %c0_6 = arith.constant 0 : index
      %c0_7 = arith.constant 0 : index
      %c0_8 = arith.constant 0 : index
      %12 = vector.load %arg5[%c0_6, %c0_7, %c0_8] : memref<1x128x128xbf16, #tpu.memory_space<vmem>>, vector<1x128x128xbf16>
      %13 = vector.shape_cast %12 : vector<1x128x128xbf16> to vector<128x128xbf16>
      %cst = arith.constant dense<0.000000e+00> : vector<32x128xf32>
      %14 = tpu.matmul %11, %13, %cst {dimension_numbers = #tpu.dot_dimension_numbers<[1], [1], [0], [0], [0, 0, 1, 0], [], []>} : vector<32x128xbf16>, vector<128x128xbf16>, vector<32x128xf32> -> vector<32x128xf32>
      %c0_9 = arith.constant 0 : index
      %c0_10 = arith.constant 0 : index
      %c0_11 = arith.constant 0 : index
      %15 = vector.load %arg6[%c0_9, %c0_10, %c0_11] : memref<1x1x128xf32, #tpu.memory_space<vmem>>, vector<1x1x128xf32>
      %16 = vector.shape_cast %15 : vector<1x1x128xf32> to vector<1x128xf32>
      %17 = vector.broadcast %16 : vector<1x128xf32> to vector<32x128xf32>
      %18 = arith.addf %14, %17 : vector<32x128xf32>
      %cst_12 = arith.constant 5.000000e-01 : f32
      %19 = vector.broadcast %cst_12 : f32 to vector<32x128xf32>
      %20 = arith.mulf %19, %18 : vector<32x128xf32>
      %cst_13 = arith.constant 4.471500e-02 : f32
      %21 = vector.broadcast %cst_13 : f32 to vector<32x128xf32>
      %22 = arith.mulf %21, %18 : vector<32x128xf32>
      %23 = arith.mulf %22, %18 : vector<32x128xf32>
      %24 = arith.mulf %23, %18 : vector<32x128xf32>
      %25 = arith.addf %18, %24 : vector<32x128xf32>
      %cst_14 = arith.constant 0.797884583 : f32
      %26 = vector.broadcast %cst_14 : f32 to vector<32x128xf32>
      %27 = arith.mulf %26, %25 : vector<32x128xf32>
      %28 = math.tanh %27 : vector<32x128xf32>
      %cst_15 = arith.constant 1.000000e+00 : f32
      %29 = vector.broadcast %cst_15 : f32 to vector<32x128xf32>
      %30 = arith.addf %29, %28 : vector<32x128xf32>
      %31 = arith.mulf %20, %30 : vector<32x128xf32>
      %32 = math.absf %31 : vector<32x128xf32>
      %33 = tpu.bitcast %32 : vector<32x128xf32> -> vector<32x128xi32>
      %c23_i32 = arith.constant 23 : i32
      %34 = vector.broadcast %c23_i32 : i32 to vector<32x128xi32>
      %35 = arith.shrsi %33, %34 : vector<32x128xi32>
      %c127_i32 = arith.constant 127 : i32
      %36 = vector.broadcast %c127_i32 : i32 to vector<32x128xi32>
      %37 = arith.subi %35, %36 : vector<32x128xi32>
      %c-6_i32 = arith.constant -6 : i32
      %38 = vector.broadcast %c-6_i32 : i32 to vector<32x128xi32>
      %39 = arith.maxsi %37, %38 : vector<32x128xi32>
      %c124_i32 = arith.constant 124 : i32
      %40 = vector.broadcast %c124_i32 : i32 to vector<32x128xi32>
      %41 = arith.addi %39, %40 : vector<32x128xi32>
      %c23_i32_16 = arith.constant 23 : i32
      %42 = vector.broadcast %c23_i32_16 : i32 to vector<32x128xi32>
      %43 = arith.shli %41, %42 : vector<32x128xi32>
      %44 = tpu.bitcast %43 : vector<32x128xi32> -> vector<32x128xf32>
      %c130_i32 = arith.constant 130 : i32
      %45 = vector.broadcast %c130_i32 : i32 to vector<32x128xi32>
      %46 = arith.subi %45, %39 : vector<32x128xi32>
      %c23_i32_17 = arith.constant 23 : i32
      %47 = vector.broadcast %c23_i32_17 : i32 to vector<32x128xi32>
      %48 = arith.shli %46, %47 : vector<32x128xi32>
      %49 = tpu.bitcast %48 : vector<32x128xi32> -> vector<32x128xf32>
      %50 = arith.mulf %32, %49 : vector<32x128xf32>
      %cst_18 = arith.constant 0x4B400000 : f32
      %51 = vector.broadcast %cst_18 : f32 to vector<32x128xf32>
      %52 = arith.addf %50, %51 : vector<32x128xf32>
      %cst_19 = arith.constant 0x4B400000 : f32
      %53 = vector.broadcast %cst_19 : f32 to vector<32x128xf32>
      %54 = arith.subf %52, %53 : vector<32x128xf32>
      %55 = arith.mulf %54, %44 : vector<32x128xf32>
      %cst_20 = arith.constant 4.480000e+02 : f32
      %56 = vector.broadcast %cst_20 : f32 to vector<32x128xf32>
      %57 = arith.minimumf %55, %56 : vector<32x128xf32>
      %cst_21 = arith.constant 0.000000e+00 : f32
      %58 = vector.broadcast %cst_21 : f32 to vector<32x128xf32>
      %59 = arith.cmpf olt, %31, %58 : vector<32x128xf32>
      %cst_22 = arith.constant 0.000000e+00 : f32
      %60 = vector.broadcast %cst_22 : f32 to vector<32x128xf32>
      %61 = arith.subf %60, %57 : vector<32x128xf32>
      %62 = arith.select %59, %61, %57 : vector<32x128xi1>, vector<32x128xf32>
      %63 = arith.truncf %62 : vector<32x128xf32> to vector<32x128xbf16>
      %c0_23 = arith.constant 0 : index
      %c0_24 = arith.constant 0 : index
      %64 = vector.load %arg10[%c0_23, %c0_24] : memref<32x128xf32, #tpu.memory_space<vmem>>, vector<32x128xf32>
      %c0_25 = arith.constant 0 : index
      %c0_26 = arith.constant 0 : index
      %c0_27 = arith.constant 0 : index
      %65 = vector.load %arg7[%c0_25, %c0_26, %c0_27] : memref<1x128x128xbf16, #tpu.memory_space<vmem>>, vector<1x128x128xbf16>
      %66 = vector.shape_cast %65 : vector<1x128x128xbf16> to vector<128x128xbf16>
      %cst_28 = arith.constant dense<0.000000e+00> : vector<32x128xf32>
      %67 = tpu.matmul %63, %66, %cst_28 {dimension_numbers = #tpu.dot_dimension_numbers<[1], [1], [0], [0], [0, 0, 1, 0], [], []>} : vector<32x128xbf16>, vector<128x128xbf16>, vector<32x128xf32> -> vector<32x128xf32>
      %68 = arith.addf %64, %67 : vector<32x128xf32>
      %c0_29 = arith.constant 0 : index
      %c0_30 = arith.constant 0 : index
      %69 = vector.load %arg10[%c0_29, %c0_30] : memref<32x128xf32, #tpu.memory_space<vmem>>, vector<32x128xf32>
      tpu.vector_store %arg10[%c0_29, %c0_30], %68 {strides = array<i32>} : memref<32x128xf32, #tpu.memory_space<vmem>>, vector<32x128xf32>,
    } else {
    }
    %c0_i32_3 = arith.constant 0 : i32
    %8 = arith.cmpi eq, %arg1, %c0_i32_3 : i32
    %9 = arith.extui %8 : i1 to i32
    %c0_i32_4 = arith.constant 0 : i32
    %10 = arith.cmpi ne, %9, %c0_i32_4 : i32
    scf.if %10 {
      %c0 = arith.constant 0 : index
      %c0_5 = arith.constant 0 : index
      %11 = vector.load %arg10[%c0, %c0_5] : memref<32x128xf32, #tpu.memory_space<vmem>>, vector<32x128xf32>
      %c0_6 = arith.constant 0 : index
      %c0_7 = arith.constant 0 : index
      %c0_8 = arith.constant 0 : index
      %12 = vector.load %arg8[%c0_6, %c0_7, %c0_8] : memref<1x1x128xf32, #tpu.memory_space<vmem>>, vector<1x1x128xf32>
      %13 = vector.shape_cast %12 : vector<1x1x128xf32> to vector<1x128xf32>
      %14 = vector.broadcast %13 : vector<1x128xf32> to vector<32x128xf32>
      %15 = arith.addf %11, %14 : vector<32x128xf32>
      %16 = arith.truncf %15 : vector<32x128xf32> to vector<32x128xbf16>
      %c0_9 = arith.constant 0 : index
      %c0_10 = arith.constant 0 : index
      %17 = vector.load %arg9[%c0_9, %c0_10] : memref<32x128xbf16, #tpu.memory_space<vmem>>, vector<32x128xbf16>
      tpu.vector_store %arg9[%c0_9, %c0_10], %16 {strides = array<i32>} : memref<32x128xbf16, #tpu.memory_space<vmem>>, vector<32x128xbf16>,
    } else {
    }
    return
  }
  func.func @transform_0(%arg0: i32, %arg1: i32, %arg2: memref<9xi32, #tpu.memory_space<smem>>, %arg3: memref<9xi32, #tpu.memory_space<smem>>) -> (i32, i32) {
    %c0_i32 = arith.constant 0 : i32
    %c0_i32_0 = arith.constant 0 : i32
    return %arg0, %c0_i32 : i32, i32
  }
  func.func @transform_1(%arg0: i32, %arg1: i32, %arg2: memref<9xi32, #tpu.memory_space<smem>>, %arg3: memref<9xi32, #tpu.memory_space<smem>>) -> (i32, i32, i32) {
    %0 = arith.index_cast %arg0 : i32 to index
    %1 = memref.load %arg2[%0] : memref<9xi32, #tpu.memory_space<smem>>
    %c0_i32 = arith.constant 0 : i32
    %c0_i32_0 = arith.constant 0 : i32
    return %1, %arg1, %c0_i32 : i32, i32, i32
  }
  func.func @transform_2(%arg0: i32, %arg1: i32, %arg2: memref<9xi32, #tpu.memory_space<smem>>, %arg3: memref<9xi32, #tpu.memory_space<smem>>) -> (i32, i32, i32) {
    %0 = arith.index_cast %arg0 : i32 to index
    %1 = memref.load %arg2[%0] : memref<9xi32, #tpu.memory_space<smem>>
    %c0_i32 = arith.constant 0 : i32
    %c0_i32_0 = arith.constant 0 : i32
    return %1, %c0_i32, %arg1 : i32, i32, i32
  }
  func.func @transform_3(%arg0: i32, %arg1: i32, %arg2: memref<9xi32, #tpu.memory_space<smem>>, %arg3: memref<9xi32, #tpu.memory_space<smem>>) -> (i32, i32, i32) {
    %0 = arith.index_cast %arg0 : i32 to index
    %1 = memref.load %arg2[%0] : memref<9xi32, #tpu.memory_space<smem>>
    %c0_i32 = arith.constant 0 : i32
    %c0_i32_0 = arith.constant 0 : i32
    return %1, %c0_i32, %arg1 : i32, i32, i32
  }
  func.func @transform_4(%arg0: i32, %arg1: i32, %arg2: memref<9xi32, #tpu.memory_space<smem>>, %arg3: memref<9xi32, #tpu.memory_space<smem>>) -> (i32, i32, i32) {
    %0 = arith.index_cast %arg0 : i32 to index
    %1 = memref.load %arg2[%0] : memref<9xi32, #tpu.memory_space<smem>>
    %c0_i32 = arith.constant 0 : i32
    %c0_i32_0 = arith.constant 0 : i32
    %c0_i32_1 = arith.constant 0 : i32
    return %1, %c0_i32, %c0_i32_0 : i32, i32, i32
  }
  func.func @transform_5(%arg0: i32, %arg1: i32, %arg2: memref<9xi32, #tpu.memory_space<smem>>, %arg3: memref<9xi32, #tpu.memory_space<smem>>) -> (i32, i32) {
    %c0_i32 = arith.constant 0 : i32
    %c0_i32_0 = arith.constant 0 : i32
    return %arg0, %c0_i32 : i32, i32
  }
}

</mosaic_0001>

<llo_original>
// kernel: custom-call.1
$region0: #{custom-call.1}
  %s0 = inlined_call_operand.vmem [shape: u32[9], index: 0, kind: output, shape index: {}]

// kernel: eq.8
$region0: #{eq.8}
  %s0 = inlined_call_operand.vmem [shape: s32[16,2], index: 0, kind: input, shape index: {}]
  %s1 = inlined_call_operand.vmem [shape: s32[32], index: 1, kind: output, shape index: {}]
  $region1: #{eq.8} parent=0
    #allocation0 [shape = 'u8[4096]{0}', space=vmem, size = 0x1000, scoped, tag = 'scoped mem for output reshape']
    %v2 = vld [vmem:[%s0] sm:$0x1]
    %vm3 = vcmask 15360
    %4 = vst.msk [vmem:[#allocation0] sm:$0x1] %vm3, %v2
    %s5 = scalar_lea.vmem %s0, 15
    %v6 = vld [vmem:[%s5] sm:$0x1]
    %7 = vrot.lane.b32.xlu0 %v6, 30
    %v8 = vpop.permute.xlu0 %7
    %vm9 = vcmask 261360
    %10 = vst.msk [vmem:[#allocation0] sm:$0x1] %vm9, %v8
    %s11 = scalar_lea.vmem %s0, 14
    %v12 = vld [vmem:[%s11] sm:$0x1]
    %13 = vrot.lane.b32.xlu0 %v12, 28
    %v14 = vpop.permute.xlu0 %13
    %vm15 = vcmask 244960
    %16 = vst.msk [vmem:[#allocation0] sm:$0x1] %vm15, %v14
    %s17 = scalar_lea.vmem %s0, 13
    %v18 = vld [vmem:[%s17] sm:$0x1]
    %19 = vrot.lane.b32.xlu0 %v18, 26
    %v20 = vpop.permute.xlu0 %19
    %vm21 = vcmask 228560
    %22 = vst.msk [vmem:[#allocation0] sm:$0x1] %vm21, %v20
    %s23 = scalar_lea.vmem %s0, 12
    %v24 = vld [vmem:[%s23] sm:$0x1]
    %25 = vrot.lane.b32.xlu0 %v24, 24
    %v26 = vpop.permute.xlu0 %25
    %vm27 = vcmask 212160
    %28 = vst.msk [vmem:[#allocation0] sm:$0x1] %vm27, %v26
    %s29 = scalar_lea.vmem %s0, 11
    %v30 = vld [vmem:[%s29] sm:$0x1]
    %31 = vrot.lane.b32.xlu0 %v30, 22
    %v32 = vpop.permute.xlu0 %31
    %vm33 = vcmask 195760
    %34 = vst.msk [vmem:[#allocation0] sm:$0x1] %vm33, %v32
    %s35 = scalar_lea.vmem %s0, 10
    %v36 = vld [vmem:[%s35] sm:$0x1]
    %37 = vrot.lane.b32.xlu0 %v36, 20
    %v38 = vpop.permute.xlu0 %37
    %vm39 = vcmask 179360
    %40 = vst.msk [vmem:[#allocation0] sm:$0x1] %vm39, %v38
    %s41 = scalar_lea.vmem %s0, 9
    %v42 = vld [vmem:[%s41] sm:$0x1]
    %43 = vrot.lane.b32.xlu0 %v42, 18
    %v44 = vpop.permute.xlu0 %43
    %vm45 = vcmask 162960
    %46 = vst.msk [vmem:[#allocation0] sm:$0x1] %vm45, %v44
    %s47 = scalar_lea.vmem %s0, 8
    %v48 = vld [vmem:[%s47] sm:$0x1]
    %49 = vrot.lane.b32.xlu0 %v48, 16
    %v50 = vpop.permute.xlu0 %49
    %vm51 = vcmask 146560
    %52 = vst.msk [vmem:[#allocation0] sm:$0x1] %vm51, %v50
    %s53 = scalar_lea.vmem %s0, 7
    %v54 = vld [vmem:[%s53] sm:$0x1]
    %55 = vrot.lane.b32.xlu0 %v54, 14
    %v56 = vpop.permute.xlu0 %55
    %vm57 = vcmask 130160
    %58 = vst.msk [vmem:[#allocation0] sm:$0x1] %vm57, %v56
    %s59 = scalar_lea.vmem %s0, 6
    %v60 = vld [vmem:[%s59] sm:$0x1]
    %61 = vrot.lane.b32.xlu0 %v60, 12
    %v62 = vpop.permute.xlu0 %61
    %vm63 = vcmask 113760
    %64 = vst.msk [vmem:[#allocation0] sm:$0x1] %vm63, %v62
    %s65 = scalar_lea.vmem %s0, 5
    %v66 = vld [vmem:[%s65] sm:$0x1]
    %67 = vrot.lane.b32.xlu0 %v66, 10
    %v68 = vpop.permute.xlu0 %67
    %vm69 = vcmask 97360
    %70 = vst.msk [vmem:[#allocation0] sm:$0x1] %vm69, %v68
    %s71 = scalar_lea.vmem %s0, 4
    %v72 = vld [vmem:[%s71] sm:$0x1]
    %73 = vrot.lane.b32.xlu0 %v72, 8
    %v74 = vpop.permute.xlu0 %73
    %vm75 = vcmask 80960
    %76 = vst.msk [vmem:[#allocation0] sm:$0x1] %vm75, %v74
    %s77 = scalar_lea.vmem %s0, 3
    %v78 = vld [vmem:[%s77] sm:$0x1]
    %79 = vrot.lane.b32.xlu0 %v78, 6
    %v80 = vpop.permute.xlu0 %79
    %vm81 = vcmask 64560
    %82 = vst.msk [vmem:[#allocation0] sm:$0x1] %vm81, %v80
    %s83 = scalar_lea.vmem %s0, 2
    %v84 = vld [vmem:[%s83] sm:$0x1]
    %85 = vrot.lane.b32.xlu0 %v84, 4
    %v86 = vpop.permute.xlu0 %85
    %vm87 = vcmask 48160
    %88 = vst.msk [vmem:[#allocation0] sm:$0x1] %vm87, %v86
    %s89 = scalar_lea.vmem %s0, 1
    %v90 = vld [vmem:[%s89] sm:$0x1]
    %91 = vrot.lane.b32.xlu0 %v90, 2
    %v92 = vpop.permute.xlu0 %91
    %vm93 = vcmask 31760
    %94 = vst.msk [vmem:[#allocation0] sm:$0x1] %vm93, %v92
    %s96 = sshllo.u32 0, 1
    %v98 = vld [vmem:[#allocation0] sm:%s96]
    %s99 = sshllo.u32 0, 1
    %100 = vst [vmem:[%s1] sm:%s99] %v98

// kernel: moe_forward.1
$region0: #{moe_forward.1}
  #allocation0 [shape = 'u32[]', space=smem, size = 0x4, offset = 0x4, fixed_abs, tag = 'smem constant byte address 0x4 - core index']
  #allocation1 [shape = 'u32[144,128]{1,0:T(1,128)}', space=vmem, size = 0x12000, scoped, tag = 'internal scratch']
  #allocation2 [shape = 'f32[32,128]{1,0:T(8,128)}', space=vmem, size = 0x4000, scoped, tag = 'scratch operand']
  #allocation3 [shape = 's32[1]{0}', space=sflag, size = 0x4, scoped, tag = 'scoped memory for moe_forward.1']
  #allocation4 [shape = 'u8[512]{0}', space=smem, size = 0x200, scoped, tag = 'prefetched SMEM operand 0']
  #allocation5 [shape = 'u8[512]{0}', space=smem, size = 0x200, scoped, tag = 'prefetched SMEM operand 1']
  %s0 = inlined_call_operand.hbm [shape: s32[9], index: 0, kind: input, shape index: {}]
  %s1 = inlined_call_operand.hbm [shape: s32[9], index: 1, kind: input, shape index: {}]
  %s2 = inlined_call_operand.hbm [shape: bf16[288,128], index: 2, kind: input, shape index: {}]
  %s3 = inlined_call_operand.hbm [shape: bf16[8,128,128], index: 3, kind: input, shape index: {}]
  %s4 = inlined_call_operand.hbm [shape: f32[8,1,128], index: 4, kind: input, shape index: {}, may-alias: {4,6}]
  %s5 = inlined_call_operand.hbm [shape: bf16[8,128,128], index: 5, kind: input, shape index: {}]
  %s6 = inlined_call_operand.hbm [shape: f32[8,1,128], index: 6, kind: input, shape index: {}, may-alias: {4,6}]
  %s7 = inlined_call_operand.hbm [shape: bf16[288,128], index: 7, kind: output, shape index: {}]
  %s8 = sld [smem:[#allocation0]]
  $region85: #{moe_forward.1} parent=0
    _
  %s10 = ssub.s32 1, %s8
  %s11 = scalar_select 0, %s10, %s8
  %13 = dma.hbm_to_smem %s0, 16, [#allocation4], [#allocation3]
  %15 = dma.hbm_to_smem %s1, 16, [#allocation5], [#allocation3]
  %16 = dma.done [#allocation3], 32
  %17 = sfence
  $region1: #{moe_forward.1} parent=0
    #allocation6 [shape = 'u8[16384]{0}', space=vmem, size = 0x4000, scoped, tag = 'input window, operand 2']
    #allocation7 [shape = 's32[2]{0}', space=sflag, size = 0x8, scoped, tag = 'scoped memory for moe_forward.1']
    #allocation8 [shape = 's32[2]{0}', space=sflag, size = 0x8, scoped, tag = 'scoped memory for moe_forward.1']
    #allocation9 [shape = 'u8[65536]{0}', space=vmem, size = 0x10000, scoped, tag = 'input window, operand 3']
    #allocation10 [shape = 's32[2]{0}', space=sflag, size = 0x8, scoped, tag = 'scoped memory for moe_forward.1']
    #allocation11 [shape = 'u8[1024]{0}', space=vmem, size = 0x400, scoped, tag = 'input window, operand 4']
    #allocation12 [shape = 'u8[65536]{0}', space=vmem, size = 0x10000, scoped, tag = 'input window, operand 5']
    #allocation13 [shape = 's32[2]{0}', space=sflag, size = 0x8, scoped, tag = 'scoped memory for moe_forward.1']
    #allocation14 [shape = 'u8[1024]{0}', space=vmem, size = 0x400, scoped, tag = 'input window, operand 6']
    #allocation15 [shape = 'u8[16384]{0}', space=vmem, size = 0x4000, scoped, tag = 'output window, operand 0']
    %18 = vsyncpa [#allocation7], 0
    %s19 = scalar_lea.sflag [#allocation7], 1
    %20 = vsyncpa %s19, 0
    %21 = vsyncpa [#allocation10], 0
    %s22 = scalar_lea.sflag [#allocation10], 1
    %23 = vsyncpa %s22, 0
    %24 = vsyncpa [#allocation13], 0
    %s25 = scalar_lea.sflag [#allocation13], 1
    %26 = vsyncpa %s25, 0
    %27 = vsyncpa [#allocation8], 0
    %s28 = scalar_lea.sflag [#allocation8], 1
    %29 = vsyncpa %s28, 0
    loop: start=0, step=1, limit=11
    $region2: #{moe_forward.1} parent=1 // loop_pre_header
      _
    $region3: #{moe_forward.1} parent=1 // loop_header
      %s31 = sphi 0, %s35
      %p32 = scmp.ge.s32.totalorder %s31, 11
      %s38 = sphi 0, %s50
      %s39 = sphi 0, %s46
      %s40 = sphi 0, %s38
      %s41 = sphi 0, %s39
      %s42 = sphi 0, %s40
      %s43 = sphi 0, %s41
      %s53 = sphi 0, %s55
      %s56 = sphi 0, %s53
      %s57 = sphi 0, %s56
      %s73 = sphi 0, %s57
      %s83 = sphi 0, %s85
      %s86 = sphi 0, %s83
      %s87 = sphi 0, %s86
      %s103 = sphi 0, %s87
      %s113 = sphi 0, %s115
      %s116 = sphi 0, %s113
      %s117 = sphi 0, %s116
      %s133 = sphi 0, %s117
      %s143 = sphi 0, %s145
      %s146 = sphi 0, %s143
      %s147 = sphi 0, %s146
      %s163 = sphi 0, %s147
      %s171 = sphi 0, %s173
      %s174 = sphi 0, %s171
      %s175 = sphi 0, %s174
      %s191 = sphi 0, %s175
      %s197 = sphi 0, %s199
      %s200 = sphi 0, %s197
      %s201 = sphi 0, %s200
      %s217 = sphi 0, %s201
    $region4: #{moe_forward.1} parent=1 // loop_header_branch
      %34 = sbr.rel (%p32) target = $region8
    $region5: #{moe_forward.1} parent=1 // loop_body
      %s36 = ssub.s32 %s31, 1
      %s37 = ssub.s32 %s31, 2
      %s44 = sadd.s32 1, %s39
      %p45 = scmp.ge.s32.totalorder %s44, 1
      %s46 = scalar_select %p45, 0, %s44
      %s47 = sadd.s32 1, %s38
      %s48 = scalar_select %p45, %s47, %s38
      %p49 = scmp.ge.s32.totalorder %s48, 9
      %s50 = scalar_select %p49, 0, %s48
      %s51 = ssub.s32 %s38, %s50
      %p52 = scmp.eq.s32.totalorder %s51, 0
      %s54 = sadd.s32 %s53, 1
      %s55 = scalar_select %p52, %s53, %s54
      %p58 = pneg %p52
      %p59 = scmp.eq.s32.totalorder %s31, 8
      %p60 = por %p58, %p59
      %p61 = scmp.ne.s32.totalorder %s53, %s56
      %p62 = scmp.eq.s32.totalorder %s31, 0
      %p63 = por %p61, %p62
      %p64 = scmp.ne.s32.totalorder %s53, %s56
      %p65 = scmp.eq.s32.totalorder %s36, 8
      %p66 = por %p64, %p65
      %p67 = scmp.ne.s32.totalorder %s56, %s57
      %p68 = scmp.eq.s32.totalorder %s36, 0
      %p69 = por %p67, %p68
      %p70 = scmp.ne.s32.totalorder %s56, %s57
      %p71 = scmp.eq.s32.totalorder %s37, 8
      %p72 = por %p70, %p71
      %p74 = scmp.ne.s32.totalorder %s57, %s73
      %p75 = scmp.eq.s32.totalorder %s37, 0
      %p76 = por %p74, %p75
      %s77 = sld [smem:[#allocation4 + %s38]]
      %s78 = sld [smem:[#allocation4 + %s50]]
      %s79 = ssub.s32 %s77, %s78
      %s80 = ssub.s32 %s39, %s46
      %s81 = sor.u32 %s79, %s80
      %p82 = scmp.eq.s32.totalorder %s81, 0
      %s84 = sadd.s32 %s83, 1
      %s85 = scalar_select %p82, %s83, %s84
      %p88 = pneg %p82
      %p89 = scmp.eq.s32.totalorder %s31, 8
      %p90 = por %p88, %p89
      %p91 = scmp.ne.s32.totalorder %s83, %s86
      %p92 = scmp.eq.s32.totalorder %s31, 0
      %p93 = por %p91, %p92
      %p94 = scmp.ne.s32.totalorder %s83, %s86
      %p95 = scmp.eq.s32.totalorder %s36, 8
      %p96 = por %p94, %p95
      %p97 = scmp.ne.s32.totalorder %s86, %s87
      %p98 = scmp.eq.s32.totalorder %s36, 0
      %p99 = por %p97, %p98
      %p100 = scmp.ne.s32.totalorder %s86, %s87
      %p101 = scmp.eq.s32.totalorder %s37, 8
      %p102 = por %p100, %p101
      %p104 = scmp.ne.s32.totalorder %s87, %s103
      %p105 = scmp.eq.s32.totalorder %s37, 0
      %p106 = por %p104, %p105
      %s107 = sld [smem:[#allocation4 + %s38]]
      %s108 = sld [smem:[#allocation4 + %s50]]
      %s109 = ssub.s32 %s107, %s108
      %s110 = ssub.s32 %s39, %s46
      %s111 = sor.u32 %s109, %s110
      %p112 = scmp.eq.s32.totalorder %s111, 0
      %s114 = sadd.s32 %s113, 1
      %s115 = scalar_select %p112, %s113, %s114
      %p118 = pneg %p112
      %p119 = scmp.eq.s32.totalorder %s31, 8
      %p120 = por %p118, %p119
      %p121 = scmp.ne.s32.totalorder %s113, %s116
      %p122 = scmp.eq.s32.totalorder %s31, 0
      %p123 = por %p121, %p122
      %p124 = scmp.ne.s32.totalorder %s113, %s116
      %p125 = scmp.eq.s32.totalorder %s36, 8
      %p126 = por %p124, %p125
      %p127 = scmp.ne.s32.totalorder %s116, %s117
      %p128 = scmp.eq.s32.totalorder %s36, 0
      %p129 = por %p127, %p128
      %p130 = scmp.ne.s32.totalorder %s116, %s117
      %p131 = scmp.eq.s32.totalorder %s37, 8
      %p132 = por %p130, %p131
      %p134 = scmp.ne.s32.totalorder %s117, %s133
      %p135 = scmp.eq.s32.totalorder %s37, 0
      %p136 = por %p134, %p135
      %s137 = sld [smem:[#allocation4 + %s38]]
      %s138 = sld [smem:[#allocation4 + %s50]]
      %s139 = ssub.s32 %s137, %s138
      %s140 = ssub.s32 %s39, %s46
      %s141 = sor.u32 %s139, %s140
      %p142 = scmp.eq.s32.totalorder %s141, 0
      %s144 = sadd.s32 %s143, 1
      %s145 = scalar_select %p142, %s143, %s144
      %p148 = pneg %p142
      %p149 = scmp.eq.s32.totalorder %s31, 8
      %p150 = por %p148, %p149
      %p151 = scmp.ne.s32.totalorder %s143, %s146
      %p152 = scmp.eq.s32.totalorder %s31, 0
      %p153 = por %p151, %p152
      %p154 = scmp.ne.s32.totalorder %s143, %s146
      %p155 = scmp.eq.s32.totalorder %s36, 8
      %p156 = por %p154, %p155
      %p157 = scmp.ne.s32.totalorder %s146, %s147
      %p158 = scmp.eq.s32.totalorder %s36, 0
      %p159 = por %p157, %p158
      %p160 = scmp.ne.s32.totalorder %s146, %s147
      %p161 = scmp.eq.s32.totalorder %s37, 8
      %p162 = por %p160, %p161
      %p164 = scmp.ne.s32.totalorder %s147, %s163
      %p165 = scmp.eq.s32.totalorder %s37, 0
      %p166 = por %p164, %p165
      %s167 = sld [smem:[#allocation4 + %s38]]
      %s168 = sld [smem:[#allocation4 + %s50]]
      %s169 = ssub.s32 %s167, %s168
      %p170 = scmp.eq.s32.totalorder %s169, 0
      %s172 = sadd.s32 %s171, 1
      %s173 = scalar_select %p170, %s171, %s172
      %p176 = pneg %p170
      %p177 = scmp.eq.s32.totalorder %s31, 8
      %p178 = por %p176, %p177
      %p179 = scmp.ne.s32.totalorder %s171, %s174
      %p180 = scmp.eq.s32.totalorder %s31, 0
      %p181 = por %p179, %p180
      %p182 = scmp.ne.s32.totalorder %s171, %s174
      %p183 = scmp.eq.s32.totalorder %s36, 8
      %p184 = por %p182, %p183
      %p185 = scmp.ne.s32.totalorder %s174, %s175
      %p186 = scmp.eq.s32.totalorder %s36, 0
      %p187 = por %p185, %p186
      %p188 = scmp.ne.s32.totalorder %s174, %s175
      %p189 = scmp.eq.s32.totalorder %s37, 8
      %p190 = por %p188, %p189
      %p192 = scmp.ne.s32.totalorder %s175, %s191
      %p193 = scmp.eq.s32.totalorder %s37, 0
      %p194 = por %p192, %p193
      %s195 = ssub.s32 %s38, %s50
      %p196 = scmp.eq.s32.totalorder %s195, 0
      %s198 = sadd.s32 %s197, 1
      %s199 = scalar_select %p196, %s197, %s198
      %p202 = pneg %p196
      %p203 = scmp.eq.s32.totalorder %s31, 8
      %p204 = por %p202, %p203
      %p205 = scmp.ne.s32.totalorder %s197, %s200
      %p206 = scmp.eq.s32.totalorder %s31, 0
      %p207 = por %p205, %p206
      %p208 = scmp.ne.s32.totalorder %s197, %s200
      %p209 = scmp.eq.s32.totalorder %s36, 8
      %p210 = por %p208, %p209
      %p211 = scmp.ne.s32.totalorder %s200, %s201
      %p212 = scmp.eq.s32.totalorder %s36, 0
      %p213 = por %p211, %p212
      %p214 = scmp.ne.s32.totalorder %s200, %s201
      %p215 = scmp.eq.s32.totalorder %s37, 8
      %p216 = por %p214, %p215
      %p218 = scmp.ne.s32.totalorder %s201, %s217
      %p219 = scmp.eq.s32.totalorder %s37, 0
      %p220 = por %p218, %p219
      %p221 = scmp.le.s32.totalorder 1, %s31
      %p222 = scmp.lt.s32.totalorder %s31, 10
      %p223 = pnand %p221, %p222
      %p224 = pneg %p223
      // Predicated region
      $region9: #{moe_forward.1} parent=5 // pred_check
        _
      $region10: #{moe_forward.1} parent=5 // pred_check_branch
        %226 = sbr.rel (%p223) target = $region12
      $region11: #{moe_forward.1} parent=5 // pred_region
        %s227 = ssub.s32 %s31, 1
      $region12: #{moe_forward.1} parent=5 // pred_fallthru
        _
      %p228 = scmp.lt.s32.totalorder %s31, 9
      // Predicated region
      $region13: #{moe_forward.1} parent=5 // pred_check
        %p229 = pneg %p228
      $region14: #{moe_forward.1} parent=5 // pred_check_branch
        %231 = sbr.rel (%p229) target = $region16
      $region15: #{moe_forward.1} parent=5 // pred_region
        // Predicated region
        $region17: #{moe_forward.1} parent=15 // pred_check
          %p232 = pneg %p63
        $region18: #{moe_forward.1} parent=15 // pred_check_branch
          %234 = sbr.rel (%p232) target = $region20
        $region19: #{moe_forward.1} parent=15 // pred_region
          %s235 = sand.u32 %s53, 1
          %s236 = scalar_lea.sflag [#allocation7], %s235
          %s237 = sand.u32 %s53, 1
          %s238 = smul.addr %s237, 16
          %s239 = scalar_lea.vmem [#allocation6], %s238
          %s240 = smul.u32 4, %s38
          %s242 = ssub.s32 256, 256
          %243 = vsyncadd %s236, %s242
          %s244 = smul.addr %s240, 64
          %s245 = scalar_lea.hbm %s2, %s244
          %s246 = sshll.u32 %s239, 4
          %s247 = int_to_ptr.vmem [resolvable:$true] %s246
          %252 = dma.hbm_to_vmem [thread:$0]  %s245, 256, %s247, %s236, 64, 64, 4
        $region20: #{moe_forward.1} parent=15 // pred_fallthru
          _
        // Predicated region
        $region21: #{moe_forward.1} parent=15 // pred_check
          %p253 = pneg %p93
        $region22: #{moe_forward.1} parent=15 // pred_check_branch
          %255 = sbr.rel (%p253) target = $region24
        $region23: #{moe_forward.1} parent=15 // pred_region
          %s256 = sand.u32 %s31, 1
          %s257 = scalar_lea.sflag [#allocation10], %s256
          %s258 = sand.u32 %s83, 1
          %s259 = smul.addr %s258, 64
          %s260 = scalar_lea.vmem [#allocation9], %s259
          %s261 = sld [smem:[#allocation4 + %s38]]
          %s262 = smul.u32 16, %s39
          %s264 = ssub.s32 1024, 1024
          %265 = vsyncadd %s257, %s264
          %s266 = smul.addr %s261, 16
          %s267 = sadd.s32 %s262, %s266
          %s268 = smul.addr %s267, 64
          %s269 = scalar_lea.hbm %s3, %s268
          %s270 = sshll.u32 %s260, 4
          %s271 = int_to_ptr.vmem [resolvable:$true] %s270
          %276 = dma.hbm_to_vmem [thread:$0]  %s269, 1024, %s271, %s257, 64, 64, 4
        $region24: #{moe_forward.1} parent=15 // pred_fallthru
          _
        // Predicated region
        $region25: #{moe_forward.1} parent=15 // pred_check
          %p277 = pneg %p123
        $region26: #{moe_forward.1} parent=15 // pred_check_branch
          %279 = sbr.rel (%p277) target = $region28
        $region27: #{moe_forward.1} parent=15 // pred_region
          %s280 = sand.u32 %s31, 1
          %s281 = scalar_lea.sflag [#allocation10], %s280
          %s282 = sand.u32 %s113, 1
          %s283 = scalar_lea.vmem [#allocation11], %s282
          %s284 = sld [smem:[#allocation4 + %s38]]
          %s286 = ssub.s32 16, 16
          %287 = vsyncadd %s281, %s286
          %s288 = sadd.s32 %s39, %s284
          %s289 = smul.addr %s288, 16
          %s290 = scalar_lea.hbm %s4, %s289
          %s292 = sshll.u32 %s283, 4
          %s293 = int_to_ptr.vmem [resolvable:$true] %s292
          %295 = dma.hbm_to_vmem [thread:$0]  %s290, 16, %s293, %s281
        $region28: #{moe_forward.1} parent=15 // pred_fallthru
          _
        // Predicated region
        $region29: #{moe_forward.1} parent=15 // pred_check
          %p296 = pneg %p153
        $region30: #{moe_forward.1} parent=15 // pred_check_branch
          %298 = sbr.rel (%p296) target = $region32
        $region31: #{moe_forward.1} parent=15 // pred_region
          %s299 = sand.u32 %s31, 1
          %s300 = scalar_lea.sflag [#allocation13], %s299
          %s301 = sand.u32 %s143, 1
          %s302 = smul.addr %s301, 64
          %s303 = scalar_lea.vmem [#allocation12], %s302
          %s304 = sld [smem:[#allocation4 + %s38]]
          %s306 = ssub.s32 1024, 1024
          %307 = vsyncadd %s300, %s306
          %s308 = smul.addr %s304, 16
          %s309 = sadd.s32 %s39, %s308
          %s310 = smul.addr %s309, 64
          %s311 = scalar_lea.hbm %s5, %s310
          %s312 = sshll.u32 %s303, 4
          %s313 = int_to_ptr.vmem [resolvable:$true] %s312
          %318 = dma.hbm_to_vmem [thread:$0]  %s311, 1024, %s313, %s300, 64, 64, 4
        $region32: #{moe_forward.1} parent=15 // pred_fallthru
          _
        // Predicated region
        $region33: #{moe_forward.1} parent=15 // pred_check
          %p319 = pneg %p181
        $region34: #{moe_forward.1} parent=15 // pred_check_branch
          %321 = sbr.rel (%p319) target = $region36
        $region35: #{moe_forward.1} parent=15 // pred_region
          %s322 = sand.u32 %s31, 1
          %s323 = scalar_lea.sflag [#allocation13], %s322
          %s324 = sand.u32 %s171, 1
          %s325 = scalar_lea.vmem [#allocation14], %s324
          %s326 = sld [smem:[#allocation4 + %s38]]
          %s328 = ssub.s32 16, 16
          %329 = vsyncadd %s323, %s328
          %s330 = smul.addr %s326, 16
          %s331 = scalar_lea.hbm %s6, %s330
          %s333 = sshll.u32 %s325, 4
          %s334 = int_to_ptr.vmem [resolvable:$true] %s333
          %336 = dma.hbm_to_vmem [thread:$0]  %s331, 16, %s334, %s323
        $region36: #{moe_forward.1} parent=15 // pred_fallthru
          _
      $region16: #{moe_forward.1} parent=5 // pred_fallthru
        _
      %p337 = scmp.le.s32.totalorder 1, %s31
      %p338 = scmp.lt.s32.totalorder %s31, 10
      %p339 = pnand %p337, %p338
      %p340 = pneg %p339
      // Predicated region
      $region37: #{moe_forward.1} parent=5 // pred_check
        _
      $region38: #{moe_forward.1} parent=5 // pred_check_branch
        %342 = sbr.rel (%p339) target = $region40
      $region39: #{moe_forward.1} parent=5 // pred_region
        %s343 = ssub.s32 %s31, 1
        %s344 = sand.u32 %s56, 1
        %s345 = scalar_lea.sflag [#allocation7], %s344
        %s346 = sand.u32 %s56, 1
        %s347 = smul.addr %s346, 16
        %s348 = scalar_lea.vmem [#allocation6], %s347
        // Predicated region
        $region41: #{moe_forward.1} parent=39 // pred_check
          %p349 = pneg %p69
        $region42: #{moe_forward.1} parent=39 // pred_check_branch
          %351 = sbr.rel (%p349) target = $region44
        $region43: #{moe_forward.1} parent=39 // pred_region
          %352 = dma.done %s345, 256
        $region44: #{moe_forward.1} parent=39 // pred_fallthru
          _
        %s353 = sand.u32 %s36, 1
        %s354 = scalar_lea.sflag [#allocation10], %s353
        %s355 = sand.u32 %s86, 1
        %s356 = smul.addr %s355, 64
        %s357 = scalar_lea.vmem [#allocation9], %s356
        // Predicated region
        $region45: #{moe_forward.1} parent=39 // pred_check
          %p358 = pneg %p99
        $region46: #{moe_forward.1} parent=39 // pred_check_branch
          %360 = sbr.rel (%p358) target = $region48
        $region47: #{moe_forward.1} parent=39 // pred_region
          %361 = dma.done %s354, 1024
        $region48: #{moe_forward.1} parent=39 // pred_fallthru
          _
        %s362 = sand.u32 %s36, 1
        %s363 = scalar_lea.sflag [#allocation10], %s362
        %s364 = sand.u32 %s116, 1
        %s365 = scalar_lea.vmem [#allocation11], %s364
        // Predicated region
        $region49: #{moe_forward.1} parent=39 // pred_check
          %p366 = pneg %p129
        $region50: #{moe_forward.1} parent=39 // pred_check_branch
          %368 = sbr.rel (%p366) target = $region52
        $region51: #{moe_forward.1} parent=39 // pred_region
          %369 = dma.done %s363, 16
        $region52: #{moe_forward.1} parent=39 // pred_fallthru
          _
        %s370 = sand.u32 %s36, 1
        %s371 = scalar_lea.sflag [#allocation13], %s370
        %s372 = sand.u32 %s146, 1
        %s373 = smul.addr %s372, 64
        %s374 = scalar_lea.vmem [#allocation12], %s373
        // Predicated region
        $region53: #{moe_forward.1} parent=39 // pred_check
          %p375 = pneg %p159
        $region54: #{moe_forward.1} parent=39 // pred_check_branch
          %377 = sbr.rel (%p375) target = $region56
        $region55: #{moe_forward.1} parent=39 // pred_region
          %378 = dma.done %s371, 1024
        $region56: #{moe_forward.1} parent=39 // pred_fallthru
          _
        %s379 = sand.u32 %s36, 1
        %s380 = scalar_lea.sflag [#allocation13], %s379
        %s381 = sand.u32 %s174, 1
        %s382 = scalar_lea.vmem [#allocation14], %s381
        // Predicated region
        $region57: #{moe_forward.1} parent=39 // pred_check
          %p383 = pneg %p187
        $region58: #{moe_forward.1} parent=39 // pred_check_branch
          %385 = sbr.rel (%p383) target = $region60
        $region59: #{moe_forward.1} parent=39 // pred_region
          %386 = dma.done %s380, 16
        $region60: #{moe_forward.1} parent=39 // pred_fallthru
          _
        %s387 = sand.u32 %s56, 1
        %s388 = scalar_lea.sflag [#allocation7], %s387
        %s389 = sand.u32 %s56, 1
        %s390 = smul.addr %s389, 16
        %s391 = scalar_lea.vmem [#allocation6], %s390
        %p392 = pneg %p69
        %p393 = pneg %p66
        %s394 = sand.u32 %s36, 1
        %s395 = scalar_lea.sflag [#allocation10], %s394
        %s396 = sand.u32 %s86, 1
        %s397 = smul.addr %s396, 64
        %s398 = scalar_lea.vmem [#allocation9], %s397
        %p399 = pneg %p99
        %p400 = pneg %p96
        %s401 = sand.u32 %s36, 1
        %s402 = scalar_lea.sflag [#allocation10], %s401
        %s403 = sand.u32 %s116, 1
        %s404 = scalar_lea.vmem [#allocation11], %s403
        %p405 = pneg %p129
        %p406 = pneg %p126
        %s407 = sand.u32 %s36, 1
        %s408 = scalar_lea.sflag [#allocation13], %s407
        %s409 = sand.u32 %s146, 1
        %s410 = smul.addr %s409, 64
        %s411 = scalar_lea.vmem [#allocation12], %s410
        %p412 = pneg %p159
        %p413 = pneg %p156
        %s414 = sand.u32 %s36, 1
        %s415 = scalar_lea.sflag [#allocation13], %s414
        %s416 = sand.u32 %s174, 1
        %s417 = scalar_lea.vmem [#allocation14], %s416
        %p418 = pneg %p187
        %p419 = pneg %p184
        %p420 = pneg %p213
        %p421 = pneg %p210
        %s422 = sand.u32 %s200, 1
        %s423 = scalar_lea.sflag [#allocation8], %s422
        %s424 = sand.u32 %s200, 1
        %s425 = smul.addr %s424, 16
        %s426 = scalar_lea.vmem [#allocation15], %s425
        %s427 = smul.u32 4, %s40
        %s428 = sld [smem:[#allocation4 + %s40]]
        %s429 = smul.u32 16, %s41
        %s430 = sld [smem:[#allocation4 + %s40]]
        %s431 = sld [smem:[#allocation4 + %s40]]
        %s432 = sld [smem:[#allocation4 + %s40]]
        %s433 = smul.u32 4, %s40
        %p435 = scmp.eq.s32.totalorder %s41, 0
        // Predicated region
        $region61: #{moe_forward.1} parent=39 // pred_check
          %p436 = pneg %p435
        $region62: #{moe_forward.1} parent=39 // pred_check_branch
          %438 = sbr.rel (%p436) target = $region64
        $region63: #{moe_forward.1} parent=39 // pred_region
          %439 = vst [vmem:[#allocation2] sm:$0xff] 0.0
          %440 = vst [vmem:[#allocation2 + $0x8] sm:$0xff] 0.0
          %441 = vst [vmem:[#allocation2 + $0x10] sm:$0xff] 0.0
          %442 = vst [vmem:[#allocation2 + $0x18] sm:$0xff] 0.0
        $region64: #{moe_forward.1} parent=39 // pred_fallthru
          _
        %s443 = sld [smem:[#allocation5 + %s40]]
        %p444 = scmp.gt.s32.totalorder %s443, 0
        // Predicated region
        $region65: #{moe_forward.1} parent=39 // pred_check
          %p445 = pneg %p444
        $region66: #{moe_forward.1} parent=39 // pred_check_branch
          %447 = sbr.rel (%p445) target = $region68
        $region67: #{moe_forward.1} parent=39 // pred_region
          %v448 = vld [vmem:[%s348] sm:$0xf]
          %v449 = vld [vmem:[%s348 + $0x4] sm:$0xf]
          %v450 = vld [vmem:[%s348 + $0x8] sm:$0xf]
          %v451 = vld [vmem:[%s348 + $0xc] sm:$0xf]
          %v452 = vld [vmem:[%s357] sm:$0xf]
          %v453 = vld [vmem:[%s357 + $0x4] sm:$0xf]
          %v454 = vld [vmem:[%s357 + $0x8] sm:$0xf]
          %v455 = vld [vmem:[%s357 + $0xc] sm:$0xf]
          %v456 = vld [vmem:[%s357 + $0x10] sm:$0xf]
          %v457 = vld [vmem:[%s357 + $0x14] sm:$0xf]
          %v458 = vld [vmem:[%s357 + $0x18] sm:$0xf]
          %v459 = vld [vmem:[%s357 + $0x1c] sm:$0xf]
          %v460 = vld [vmem:[%s357 + $0x20] sm:$0xf]
          %v461 = vld [vmem:[%s357 + $0x24] sm:$0xf]
          %v462 = vld [vmem:[%s357 + $0x28] sm:$0xf]
          %v463 = vld [vmem:[%s357 + $0x2c] sm:$0xf]
          %v464 = vld [vmem:[%s357 + $0x30] sm:$0xf]
          %v465 = vld [vmem:[%s357 + $0x34] sm:$0xf]
          %v466 = vld [vmem:[%s357 + $0x38] sm:$0xf]
          %v467 = vld [vmem:[%s357 + $0x3c] sm:$0xf]
          %v468 = vld [vmem:[%s365] sm:$0x1]
          %v470 = vlaneseq
          %v471 = vshrl.u32 %v470, 7
          %v472 = vsub.s32 0, %v471
          %v473 = vrot.slane %v468, %v472
          %v479 = vunpack.c.l.b16 %v448
          %v480 = vunpack.c.l.b16 %v449
          %v481 = vunpack.c.l.b16 %v450
          %v482 = vunpack.c.l.b16 %v451
          %v483 = vpack.c.b16 %v480, %v479
          %v484 = vpack.c.b16 %v482, %v481
          %v503 = vunpack.c.l.b16 %v452
          %v504 = vunpack.c.l.b16 %v453
          %v505 = vunpack.c.l.b16 %v454
          %v506 = vunpack.c.l.b16 %v455
          %v507 = vunpack.c.l.b16 %v456
          %v508 = vunpack.c.l.b16 %v457
          %v509 = vunpack.c.l.b16 %v458
          %v510 = vunpack.c.l.b16 %v459
          %v511 = vunpack.c.l.b16 %v460
          %v512 = vunpack.c.l.b16 %v461
          %v513 = vunpack.c.l.b16 %v462
          %v514 = vunpack.c.l.b16 %v463
          %v515 = vunpack.c.l.b16 %v464
          %v516 = vunpack.c.l.b16 %v465
          %v517 = vunpack.c.l.b16 %v466
          %v518 = vunpack.c.l.b16 %v467
          %v519 = vpack.c.b16 %v504, %v503
          %v520 = vpack.c.b16 %v506, %v505
          %v521 = vpack.c.b16 %v508, %v507
          %v522 = vpack.c.b16 %v510, %v509
          %v523 = vpack.c.b16 %v512, %v511
          %v524 = vpack.c.b16 %v514, %v513
          %v525 = vpack.c.b16 %v516, %v515
          %v526 = vpack.c.b16 %v518, %v517
          %535 = vmatprep.subr.bf16.mxu0 0
          %536 = vmatpush1.bf16.xpose.msra.mxu0 %v519
          %537 = vmatprep.subr.bf16.mxu0 0
          %538 = vmatpush1.bf16.xpose.msra.mxu0 %v520
          %539 = vmatprep.subr.bf16.mxu0 0
          %540 = vmatpush1.bf16.xpose.msra.mxu0 %v521
          %541 = vmatprep.subr.bf16.mxu0 0
          %542 = vmatpush1.bf16.xpose.msra.mxu0 %v522
          %543 = vmatprep.subr.bf16.mxu0 0
          %544 = vmatpush1.bf16.xpose.msra.mxu0 %v523
          %545 = vmatprep.subr.bf16.mxu0 0
          %546 = vmatpush1.bf16.xpose.msra.mxu0 %v524
          %547 = vmatprep.subr.bf16.mxu0 0
          %548 = vmatpush1.bf16.xpose.msra.mxu0 %v525
          %549 = vmatprep.subr.bf16.mxu0 0
          %550 = vmatpush1.bf16.xpose.msra.mxu0 %v526
          %551 = vmatprep.subr.bf16.mxu0 0
          %552 = vmatpush1.bf16.xpose.msra.mxu0 0
          %553 = vmatprep.subr.bf16.mxu0 0
          %554 = vmatpush1.bf16.xpose.msra.mxu0 0
          %555 = vmatprep.subr.bf16.mxu0 0
          %556 = vmatpush1.bf16.xpose.msra.mxu0 0
          %557 = vmatprep.subr.bf16.mxu0 0
          %558 = vmatpush1.bf16.xpose.msra.mxu0 0
          %559 = vmatprep.subr.bf16.mxu0 0
          %560 = vmatpush1.bf16.xpose.msra.mxu0 0
          %561 = vmatprep.subr.bf16.mxu0 0
          %562 = vmatpush1.bf16.xpose.msra.mxu0 0
          %563 = vmatprep.subr.bf16.mxu0 0
          %564 = vmatpush1.bf16.xpose.msra.mxu0 0
          %565 = vmatprep.subr.bf16.mxu0 0
          %566 = vmatpush1.bf16.xpose.msra.mxu0 0
          %567 = vmatprep.mubr.bf16.mxu0 0
          %568 = vmatmul.mubr.bf16.gmra.mrb[0].mxu0 %v483
          %v569 = vpop.f32.mrb[0].mxu0
          %v570 = vadd.f32 %v473, %v569
          %v571 = vpop.f32.mrb[0].mxu0
          %v572 = vpop.f32.mrb[0].mxu0
          %v573 = vadd.f32 %v473, %v572
          %v574 = vpop.f32.mrb[0].mxu0
          %575 = vmatprep.mubr.bf16.mxu0 0
          %576 = vmatmul.mubr.bf16.gmra.mrb[0].mxu0 %v484
          %v577 = vpop.f32.mrb[0].mxu0
          %v578 = vadd.f32 %v473, %v577
          %v579 = vpop.f32.mrb[0].mxu0
          %v580 = vpop.f32.mrb[0].mxu0
          %v581 = vadd.f32 %v473, %v580
          %v582 = vpop.f32.mrb[0].mxu0
          %583 = vdwg.mxu0
          %v584 = vmul.f32 %v570, 0.5
          %v585 = vmul.f32 %v573, 0.5
          %v586 = vmul.f32 %v578, 0.5
          %v587 = vmul.f32 %v581, 0.5
          %v588 = vmul.f32 %v570, 0.044715
          %v589 = vmul.f32 %v573, 0.044715
          %v590 = vmul.f32 %v578, 0.044715
          %v591 = vmul.f32 %v581, 0.044715
          %v592 = vmul.f32 %v588, %v570
          %v593 = vmul.f32 %v589, %v573
          %v594 = vmul.f32 %v590, %v578
          %v595 = vmul.f32 %v591, %v581
          %v596 = vmul.f32 %v592, %v570
          %v597 = vmul.f32 %v593, %v573
          %v598 = vmul.f32 %v594, %v578
          %v599 = vmul.f32 %v595, %v581
          %v600 = vadd.f32 %v570, %v596
          %v601 = vadd.f32 %v573, %v597
          %v602 = vadd.f32 %v578, %v598
          %v603 = vadd.f32 %v581, %v599
          %v604 = vmul.f32 %v600, 0.7978846
          %v605 = vmul.f32 %v601, 0.7978846
          %v606 = vmul.f32 %v602, 0.7978846
          %v607 = vmul.f32 %v603, 0.7978846
          %v608 = vtanh.pop %v604
          %v609 = vtanh.pop %v605
          %v610 = vtanh.pop %v606
          %v611 = vtanh.pop %v607
          %v612 = vadd.f32 %v608, 1.0
          %v613 = vadd.f32 %v609, 1.0
          %v614 = vadd.f32 %v610, 1.0
          %v615 = vadd.f32 %v611, 1.0
          %v616 = vmul.f32 %v584, %v612
          %v617 = vmul.f32 %v585, %v613
          %v618 = vmul.f32 %v586, %v614
          %v619 = vmul.f32 %v587, %v615
          %v620 = vand.u32 2147483647, %v616
          %v621 = vand.u32 2147483647, %v617
          %v622 = vand.u32 2147483647, %v618
          %v623 = vand.u32 2147483647, %v619
          %v628 = vshra.s32 %v620, 23
          %v629 = vshra.s32 %v621, 23
          %v630 = vshra.s32 %v622, 23
          %v631 = vshra.s32 %v623, 23
          %v632 = vsub.s32 %v628, 127
          %v633 = vsub.s32 %v629, 127
          %v634 = vsub.s32 %v630, 127
          %v635 = vsub.s32 %v631, 127
          %vm636 = vcmp.gt.s32.totalorder %v632, 4294967290
          %v637 = vsel %vm636, %v632, 4294967290
          %vm638 = vcmp.gt.s32.totalorder %v633, 4294967290
          %v639 = vsel %vm638, %v633, 4294967290
          %vm640 = vcmp.gt.s32.totalorder %v634, 4294967290
          %v641 = vsel %vm640, %v634, 4294967290
          %vm642 = vcmp.gt.s32.totalorder %v635, 4294967290
          %v643 = vsel %vm642, %v635, 4294967290
          %v644 = vadd.s32 %v637, 124
          %v645 = vadd.s32 %v639, 124
          %v646 = vadd.s32 %v641, 124
          %v647 = vadd.s32 %v643, 124
          %v648 = vshll.u32 %v644, 23
          %v649 = vshll.u32 %v645, 23
          %v650 = vshll.u32 %v646, 23
          %v651 = vshll.u32 %v647, 23
          %v656 = vsub.s32 130, %v637
          %v657 = vsub.s32 130, %v639
          %v658 = vsub.s32 130, %v641
          %v659 = vsub.s32 130, %v643
          %v660 = vshll.u32 %v656, 23
          %v661 = vshll.u32 %v657, 23
          %v662 = vshll.u32 %v658, 23
          %v663 = vshll.u32 %v659, 23
          %v668 = vmul.f32 %v620, %v660
          %v669 = vmul.f32 %v621, %v661
          %v670 = vmul.f32 %v622, %v662
          %v671 = vmul.f32 %v623, %v663
          %v672 = vadd.f32 %v668, 12582912.0
          %v673 = vadd.f32 %v669, 12582912.0
          %v674 = vadd.f32 %v670, 12582912.0
          %v675 = vadd.f32 %v671, 12582912.0
          %v676 = vsub.f32 %v672, 12582912.0
          %v677 = vsub.f32 %v673, 12582912.0
          %v678 = vsub.f32 %v674, 12582912.0
          %v679 = vsub.f32 %v675, 12582912.0
          %v680 = vmul.f32 %v676, %v648
          %v681 = vmul.f32 %v677, %v649
          %v682 = vmul.f32 %v678, %v650
          %v683 = vmul.f32 %v679, %v651
          %v684 = vmin.f32 %v680, 448.0
          %v685 = vmin.f32 %v681, 448.0
          %v686 = vmin.f32 %v682, 448.0
          %v687 = vmin.f32 %v683, 448.0
          %vm688 = vcmp.lt.f32.partialorder %v616, 0.0
          %vm689 = vcmp.lt.f32.partialorder %v617, 0.0
          %vm690 = vcmp.lt.f32.partialorder %v618, 0.0
          %vm691 = vcmp.lt.f32.partialorder %v619, 0.0
          %v692 = vsub.f32 0.0, %v684
          %v693 = vsub.f32 0.0, %v685
          %v694 = vsub.f32 0.0, %v686
          %v695 = vsub.f32 0.0, %v687
          %v696 = vsel %vm688, %v692, %v684
          %v697 = vsel %vm689, %v693, %v685
          %v698 = vsel %vm690, %v694, %v686
          %v699 = vsel %vm691, %v695, %v687
          %v700 = vpack.c.bf16 %v697, %v696
          %v701 = vpack.c.bf16 %v699, %v698
          %v702 = vld [vmem:[#allocation2] sm:$0xff]
          %v703 = vld [vmem:[#allocation2 + $0x8] sm:$0xff]
          %v704 = vld [vmem:[#allocation2 + $0x10] sm:$0xff]
          %v705 = vld [vmem:[#allocation2 + $0x18] sm:$0xff]
          %v706 = vld [vmem:[%s374] sm:$0xf]
          %v707 = vld [vmem:[%s374 + $0x4] sm:$0xf]
          %v708 = vld [vmem:[%s374 + $0x8] sm:$0xf]
          %v709 = vld [vmem:[%s374 + $0xc] sm:$0xf]
          %v710 = vld [vmem:[%s374 + $0x10] sm:$0xf]
          %v711 = vld [vmem:[%s374 + $0x14] sm:$0xf]
          %v712 = vld [vmem:[%s374 + $0x18] sm:$0xf]
          %v713 = vld [vmem:[%s374 + $0x1c] sm:$0xf]
          %v714 = vld [vmem:[%s374 + $0x20] sm:$0xf]
          %v715 = vld [vmem:[%s374 + $0x24] sm:$0xf]
          %v716 = vld [vmem:[%s374 + $0x28] sm:$0xf]
          %v717 = vld [vmem:[%s374 + $0x2c] sm:$0xf]
          %v718 = vld [vmem:[%s374 + $0x30] sm:$0xf]
          %v719 = vld [vmem:[%s374 + $0x34] sm:$0xf]
          %v720 = vld [vmem:[%s374 + $0x38] sm:$0xf]
          %v721 = vld [vmem:[%s374 + $0x3c] sm:$0xf]
          %v738 = vunpack.c.l.b16 %v706
          %v739 = vunpack.c.l.b16 %v707
          %v740 = vunpack.c.l.b16 %v708
          %v741 = vunpack.c.l.b16 %v709
          %v742 = vunpack.c.l.b16 %v710
          %v743 = vunpack.c.l.b16 %v711
          %v744 = vunpack.c.l.b16 %v712
          %v745 = vunpack.c.l.b16 %v713
          %v746 = vunpack.c.l.b16 %v714
          %v747 = vunpack.c.l.b16 %v715
          %v748 = vunpack.c.l.b16 %v716
          %v749 = vunpack.c.l.b16 %v717
          %v750 = vunpack.c.l.b16 %v718
          %v751 = vunpack.c.l.b16 %v719
          %v752 = vunpack.c.l.b16 %v720
          %v753 = vunpack.c.l.b16 %v721
          %v754 = vpack.c.b16 %v739, %v738
          %v755 = vpack.c.b16 %v741, %v740
          %v756 = vpack.c.b16 %v743, %v742
          %v757 = vpack.c.b16 %v745, %v744
          %v758 = vpack.c.b16 %v747, %v746
          %v759 = vpack.c.b16 %v749, %v748
          %v760 = vpack.c.b16 %v751, %v750
          %v761 = vpack.c.b16 %v753, %v752
          %770 = vmatprep.subr.bf16.mxu0 0
          %771 = vmatpush1.bf16.xpose.msra.mxu0 %v754
          %772 = vmatprep.subr.bf16.mxu0 0
          %773 = vmatpush1.bf16.xpose.msra.mxu0 %v755
          %774 = vmatprep.subr.bf16.mxu0 0
          %775 = vmatpush1.bf16.xpose.msra.mxu0 %v756
          %776 = vmatprep.subr.bf16.mxu0 0
          %777 = vmatpush1.bf16.xpose.msra.mxu0 %v757
          %778 = vmatprep.subr.bf16.mxu0 0
          %779 = vmatpush1.bf16.xpose.msra.mxu0 %v758
          %780 = vmatprep.subr.bf16.mxu0 0
          %781 = vmatpush1.bf16.xpose.msra.mxu0 %v759
          %782 = vmatprep.subr.bf16.mxu0 0
          %783 = vmatpush1.bf16.xpose.msra.mxu0 %v760
          %784 = vmatprep.subr.bf16.mxu0 0
          %785 = vmatpush1.bf16.xpose.msra.mxu0 %v761
          %786 = vmatprep.subr.bf16.mxu0 0
          %787 = vmatpush1.bf16.xpose.msra.mxu0 0
          %788 = vmatprep.subr.bf16.mxu0 0
          %789 = vmatpush1.bf16.xpose.msra.mxu0 0
          %790 = vmatprep.subr.bf16.mxu0 0
          %791 = vmatpush1.bf16.xpose.msra.mxu0 0
          %792 = vmatprep.subr.bf16.mxu0 0
          %793 = vmatpush1.bf16.xpose.msra.mxu0 0
          %794 = vmatprep.subr.bf16.mxu0 0
          %795 = vmatpush1.bf16.xpose.msra.mxu0 0
          %796 = vmatprep.subr.bf16.mxu0 0
          %797 = vmatpush1.bf16.xpose.msra.mxu0 0
          %798 = vmatprep.subr.bf16.mxu0 0
          %799 = vmatpush1.bf16.xpose.msra.mxu0 0
          %800 = vmatprep.subr.bf16.mxu0 0
          %801 = vmatpush1.bf16.xpose.msra.mxu0 0
          %802 = vmatprep.mubr.bf16.mxu0 0
          %803 = vmatmul.mubr.bf16.gmra.mrb[0].mxu0 %v700
          %v804 = vpop.f32.mrb[0].mxu0
          %v805 = vadd.f32 0.0, %v804
          %v806 = vpop.f32.mrb[0].mxu0
          %v807 = vpop.f32.mrb[0].mxu0
          %v808 = vadd.f32 0.0, %v807
          %v809 = vpop.f32.mrb[0].mxu0
          %810 = vmatprep.mubr.bf16.mxu0 0
          %811 = vmatmul.mubr.bf16.gmra.mrb[0].mxu0 %v701
          %v812 = vpop.f32.mrb[0].mxu0
          %v813 = vadd.f32 0.0, %v812
          %v814 = vpop.f32.mrb[0].mxu0
          %v815 = vpop.f32.mrb[0].mxu0
          %v816 = vadd.f32 0.0, %v815
          %v817 = vpop.f32.mrb[0].mxu0
          %818 = vdwg.mxu0
          %v819 = vadd.f32 %v702, %v805
          %v820 = vadd.f32 %v703, %v808
          %v821 = vadd.f32 %v704, %v813
          %v822 = vadd.f32 %v705, %v816
          %823 = vst [vmem:[#allocation2] sm:$0xff] %v819
          %824 = vst [vmem:[#allocation2 + $0x8] sm:$0xff] %v820
          %825 = vst [vmem:[#allocation2 + $0x10] sm:$0xff] %v821
          %826 = vst [vmem:[#allocation2 + $0x18] sm:$0xff] %v822
        $region68: #{moe_forward.1} parent=39 // pred_fallthru
          _
        // Predicated region
        $region69: #{moe_forward.1} parent=39 // pred_check
          %p827 = pneg %p435
        $region70: #{moe_forward.1} parent=39 // pred_check_branch
          %829 = sbr.rel (%p827) target = $region72
        $region71: #{moe_forward.1} parent=39 // pred_region
          %v830 = vld [vmem:[#allocation2] sm:$0xff]
          %v831 = vld [vmem:[#allocation2 + $0x8] sm:$0xff]
          %v832 = vld [vmem:[#allocation2 + $0x10] sm:$0xff]
          %v833 = vld [vmem:[#allocation2 + $0x18] sm:$0xff]
          %v834 = vld [vmem:[%s382] sm:$0x1]
          %v836 = vlaneseq
          %v837 = vshrl.u32 %v836, 7
          %v838 = vsub.s32 0, %v837
          %v839 = vrot.slane %v834, %v838
          %v841 = vadd.f32 %v830, %v839
          %v842 = vadd.f32 %v831, %v839
          %v843 = vadd.f32 %v832, %v839
          %v844 = vadd.f32 %v833, %v839
          %v845 = vpack.c.bf16 %v842, %v841
          %v846 = vpack.c.bf16 %v844, %v843
          %v849 = vunpack.c.l.b16 %v845
          %v850 = vunpack.c.h.b16 %v845
          %v851 = vunpack.c.l.b16 %v846
          %v852 = vunpack.c.h.b16 %v846
          %v853 = vpack.c.b16 %v849, %v849
          %v854 = vpack.c.b16 %v850, %v850
          %v855 = vpack.c.b16 %v851, %v851
          %v856 = vpack.c.b16 %v852, %v852
          %861 = vst [vmem:[%s426] sm:$0xf] %v853
          %862 = vst [vmem:[%s426 + $0x4] sm:$0xf] %v854
          %863 = vst [vmem:[%s426 + $0x8] sm:$0xf] %v855
          %864 = vst [vmem:[%s426 + $0xc] sm:$0xf] %v856
        $region72: #{moe_forward.1} parent=39 // pred_fallthru
          _
        %s865 = sand.u32 %s200, 1
        %s866 = scalar_lea.sflag [#allocation8], %s865
        %s867 = sand.u32 %s200, 1
        %s868 = smul.addr %s867, 16
        %s869 = scalar_lea.vmem [#allocation15], %s868
        // Predicated region
        $region73: #{moe_forward.1} parent=39 // pred_check
          %p870 = pneg %p210
        $region74: #{moe_forward.1} parent=39 // pred_check_branch
          %872 = sbr.rel (%p870) target = $region76
        $region75: #{moe_forward.1} parent=39 // pred_region
          %s873 = smul.u32 4, %s40
          %s875 = ssub.s32 256, 256
          %876 = vsyncadd %s866, %s875
          %s877 = smul.addr %s873, 64
          %s878 = scalar_lea.hbm %s7, %s877
          %s879 = sshll.u32 %s869, 4
          %s880 = int_to_ptr.vmem [resolvable:$true] %s879
          %885 = dma.vmem_to_hbm [thread:$0]  %s880, 256, %s878, %s866, 64, 64, 4
        $region76: #{moe_forward.1} parent=39 // pred_fallthru
          _
      $region40: #{moe_forward.1} parent=5 // pred_fallthru
        _
      %p886 = scmp.le.s32.totalorder 2, %s31
      // Predicated region
      $region77: #{moe_forward.1} parent=5 // pred_check
        %p887 = pneg %p886
      $region78: #{moe_forward.1} parent=5 // pred_check_branch
        %889 = sbr.rel (%p887) target = $region80
      $region79: #{moe_forward.1} parent=5 // pred_region
        %s890 = ssub.s32 %s31, 2
        // Predicated region
        $region81: #{moe_forward.1} parent=79 // pred_check
          %p891 = pneg %p216
        $region82: #{moe_forward.1} parent=79 // pred_check_branch
          %893 = sbr.rel (%p891) target = $region84
        $region83: #{moe_forward.1} parent=79 // pred_region
          %s894 = sand.u32 %s201, 1
          %s895 = scalar_lea.sflag [#allocation8], %s894
          %s896 = sand.u32 %s201, 1
          %s897 = smul.addr %s896, 16
          %s898 = scalar_lea.vmem [#allocation15], %s897
          %899 = dma.done %s895, 256
        $region84: #{moe_forward.1} parent=79 // pred_fallthru
          _
      $region80: #{moe_forward.1} parent=5 // pred_fallthru
        _
    $region6: #{moe_forward.1} parent=1 // loop_footer
      %s35 = sadd.s32 1, %s31
    $region7: #{moe_forward.1} parent=1 // loop_footer_branch
      %30 = sbr.rel target = $region3
    $region8: #{moe_forward.1} parent=1 // loop_exit
      _
    %900 = vsyncpa [#allocation7], 1
    %s901 = scalar_lea.sflag [#allocation7], 1
    %902 = vsyncpa %s901, 1
    %903 = vsyncpa [#allocation10], 1
    %s904 = scalar_lea.sflag [#allocation10], 1
    %905 = vsyncpa %s904, 1
    %906 = vsyncpa [#allocation13], 1
    %s907 = scalar_lea.sflag [#allocation13], 1
    %908 = vsyncpa %s907, 1
    %909 = vsyncpa [#allocation8], 1
    %s910 = scalar_lea.sflag [#allocation8], 1
    %911 = vsyncpa %s910, 1

</llo_original>
